<compile_context>
chip_gen: v7x
topology: tpu7x:2x2x1
jax: 0.10.0
libtpu: 0.0.40
codegen_flags: <defaults>
</compile_context>

<pallas_src>
import functools

import numpy as np
import jax
import jax.numpy as jnp
from jax.experimental import pallas as pl
from jax.experimental.pallas import tpu as pltpu

_EPS = 1e-5
_LANES = 128
# Rows of 128 lanes per feature tile: 4096*128*4B = 2 MiB per f32 input block
# (3 inputs x 2 pipeline buffers = 12 MiB).  Multiple of 32 so int8 masks and
# bf16 inputs tile cleanly as well.
_MAX_TR = 4096
_VMEM_LIMIT = 48 * 1024 * 1024   # headroom under v7x's 64 MiB physical VMEM


def _dice_sums_kernel(pre_ref, tar_ref, lun_ref, acc_ref, *,
                      tile_rows, rows_valid, nk_split, mask_rows):
    """Accumulate 4 per-batch statistics into a fused (1, 32, 128) f32 slab.

    Sublanes [ 0: 8) : sum(pre * tar)   (intersection)
    Sublanes [ 8:16) : sum(tar)
    Sublanes [16:24) : sum(pre * lung)
    Sublanes [24:32) : sum(pre)
    The 8-sublane x 128-lane reduction happens once, in the JAX epilogue.
    """
    s = pl.program_id(1)     # core-split axis (>1 only when batch can't feed 2 TCs)
    k = pl.program_id(2)     # feature-row reduction axis ("arbitrary")

    @pl.when(k == 0)
    def _():
        acc_ref[...] = jnp.zeros_like(acc_ref)

    pre = pre_ref[0].astype(jnp.float32)      # (TR, 128), cast in-register
    tar = tar_ref[0].astype(jnp.float32)
    lun = lun_ref[0].astype(jnp.float32)

    def accumulate(p, t):
        if tile_rows % 8 == 0:
            # Fold (TR,128) -> (8,128) with plain vreg adds: no per-step XLU
            # cross-sublane reduce and unmasked full-vreg accumulator stores.
            def fold(x):
                return x.reshape(-1, 8, _LANES).sum(axis=0)
            acc_ref[0, 0:8] += fold(p * t)
            acc_ref[0, 8:16] += fold(t)
            acc_ref[0, 16:24] += fold(p * lun)
            acc_ref[0, 24:32] += fold(p)
        else:
            # Tiny-R fallback (single grid step): cross-sublane reduce is fine.
            def red(x):
                return jnp.sum(x, axis=0, keepdims=True)
            acc_ref[0, 0:1] += red(p * t)
            acc_ref[0, 8:9] += red(t)
            acc_ref[0, 16:17] += red(p * lun)
            acc_ref[0, 24:25] += red(p)

    if not mask_rows:
        accumulate(pre, tar)
    else:
        row0 = (s * nk_split + k) * tile_rows           # global first row of block
        is_full = row0 + tile_rows <= rows_valid

        @pl.when(is_full)                                # steady-state fast path
        def _():
            accumulate(pre, tar)

        @pl.when(jnp.logical_not(is_full))               # only overhanging tile(s)
        def _():
            rows = jax.lax.broadcasted_iota(jnp.int32, (tile_rows, _LANES), 0) + row0
            valid = rows < rows_valid
            zero = jnp.zeros((tile_rows, _LANES), jnp.float32)
            # Only pre and tar need masking: once pre is zeroed, pre*lung and
            # sum(pre) are already correct, so lung stays untouched.
            accumulate(jnp.where(valid, pre, zero), jnp.where(valid, tar, zero))


def dice_loss_cons(predict, target, lung, lam):
    assert predict.shape == target.shape, \
        'the size of predict and target must be equal.'
    num = predict.shape[0]
    D = int(np.prod(predict.shape[1:]))
    R = (D + _LANES - 1) // _LANES

    def prep(x):
        if D % _LANES != 0:
            # TODO(synk): ragged lane tail (D % 128 != 0) still falls back to a
            # padded HBM copy; zero padding is exact for these pure sums.
            flat = jnp.reshape(x, (num, D))
            flat = jnp.pad(flat, ((0, 0), (0, R * _LANES - D)))
            return flat.reshape(num, R, _LANES)
        # Copy-less reshape; inputs keep their native (possibly narrow) dtype --
        # the f32 cast happens in-register inside the kernel.
        return jnp.reshape(x, (num, R, _LANES))

    pre3, tar3, lun3 = prep(predict), prep(target), prep(lung)

    tr = R if R <= _MAX_TR else _MAX_TR
    n_blocks = (R + tr - 1) // tr
    # If the batch cannot feed both TensorCores (v7x), split the row reduction
    # across a second "parallel" grid axis instead.
    nsplit = 2 if (num < 2 and n_blocks >= 2) else 1
    nk_split = (n_blocks + nsplit - 1) // nsplit
    mask_rows = (nsplit * nk_split * tr != R)
    needs_clamp = (nsplit * nk_split > n_blocks)
    last_blk = n_blocks - 1

    def in_map(i, s, k):
        kk = s * nk_split + k
        if needs_clamp:
            kk = jnp.minimum(kk, last_blk)   # keep DMA in-bounds; kernel masks it
        return (i, kk, 0)

    kernel = functools.partial(_dice_sums_kernel, tile_rows=tr, rows_valid=R,
                               nk_split=nk_split, mask_rows=mask_rows)

    in_spec = pl.BlockSpec((1, tr, _LANES), in_map)
    out_spec = pl.BlockSpec((1, 32, _LANES), lambda i, s, k: (i, s, 0))
    out_sds = jax.ShapeDtypeStruct((num, nsplit * 32, _LANES), jnp.float32)

    out = pl.pallas_call(
        kernel,
        out_shape=out_sds,
        grid_spec=pltpu.PrefetchScalarGridSpec(
            num_scalar_prefetch=0,
            grid=(num, nsplit, nk_split),
            in_specs=[in_spec, in_spec, in_spec],
            out_specs=out_spec,
        ),
        compiler_params=pltpu.CompilerParams(
            dimension_semantics=("parallel", "parallel", "arbitrary"),
            vmem_limit_bytes=_VMEM_LIMIT),
    )(pre3, tar3, lun3)

    # Tiny epilogue: fold splits + 8 sublanes + 128 lanes once, in plain JAX.
    stats = jnp.sum(out.reshape(num, nsplit, 4, 8, _LANES), axis=(1, 3, 4))
    inter, tar_sum, lun_inter, pre_size = (stats[:, j] for j in range(4))
    union = pre_size + tar_sum   # sum(pre + tar) == sum(pre) + sum(tar)

    score = (1.0 - jnp.mean(2.0 * (inter + _EPS) / (union + _EPS))
             + lam * (1.0 - jnp.mean(lun_inter / pre_size)))
    return score


def _reference(predict, target, lung, lam, eps=_EPS):
    num = predict.shape[0]
    pre = predict.reshape(num, -1).astype(jnp.float32)
    tar = target.reshape(num, -1).astype(jnp.float32)
    lun = lung.reshape(num, -1).astype(jnp.float32)
    intersection = (pre * tar).sum(-1)
    union = (pre + tar).sum(-1)
    lun_inter = (pre * lun).sum(-1)
    pre_size = pre.sum(-1)
    return (1.0 - jnp.mean(2.0 * (intersection + eps) / (union + eps))
            + lam * (1.0 - jnp.mean(lun_inter / pre_size)))


if __name__ == "__main__":
    key = jax.random.PRNGKey(0)
    k1, k2, k3 = jax.random.split(key, 3)

    # NCHW volume: batch=2, channels=4, spatial=32x32.  Soft f32 predictions;
    # binary target / lung masks are fed as int8 (halves HBM bytes for two of
    # the three streams -- the kernel casts to f32 in-register).
    predict = jax.random.uniform(k1, (2, 4, 32, 32), dtype=jnp.float32)
    target = (jax.random.uniform(k2, (2, 4, 32, 32)) > 0.5).astype(jnp.int8)
    lung = (jax.random.uniform(k3, (2, 4, 32, 32)) > 0.3).astype(jnp.int8)
    lam = 0.5

    out = jax.block_until_ready(dice_loss_cons(predict, target, lung, lam))
    ref = jax.block_until_ready(_reference(predict, target, lung, lam))

    np.testing.assert_allclose(np.asarray(out), np.asarray(ref),
                               rtol=1e-5, atol=1e-5)
    print("KERNEL_OK")
</pallas_src>

<mosaic_0001>
module attributes {stable_mosaic.version = 11 : i64} {
  func.func @_dice_sums_kernel(%arg0: i32, %arg1: i32, %arg2: i32, %arg3: memref<1x32x128xf32, #tpu.memory_space<vmem>>, %arg4: memref<1x32x128xi8, #tpu.memory_space<vmem>>, %arg5: memref<1x32x128xi8, #tpu.memory_space<vmem>>, %arg6: memref<1x32x128xf32, #tpu.memory_space<vmem>>) attributes {dimension_semantics = [#tpu.dimension_semantics<parallel>, #tpu.dimension_semantics<parallel>, #tpu.dimension_semantics<arbitrary>], iteration_bounds = array<i64: 2, 1, 1>, scalar_prefetch = 0 : i64, scratch_operands = 0 : i64, tpu.core_type = #tpu.core_type<tc>, window_params = [{transform_indices = @transform_0, window_bounds = array<i64: 1, 32, 128>}, {transform_indices = @transform_1, window_bounds = array<i64: 1, 32, 128>}, {transform_indices = @transform_2, window_bounds = array<i64: 1, 32, 128>}, {transform_indices = @transform_3, window_bounds = array<i64: 1, 32, 128>}]} {
    %c0_i32 = arith.constant 0 : i32
    %0 = arith.cmpi eq, %arg2, %c0_i32 : i32
    %1 = arith.extui %0 : i1 to i32
    %c0_i32_0 = arith.constant 0 : i32
    %2 = arith.cmpi ne, %1, %c0_i32_0 : i32
    scf.if %2 {
      %cst_33 = arith.constant 0.000000e+00 : f32
      %45 = vector.broadcast %cst_33 : f32 to vector<1x32x128xf32>
      %c0_34 = arith.constant 0 : index
      %c0_35 = arith.constant 0 : index
      %c0_36 = arith.constant 0 : index
      %46 = vector.load %arg6[%c0_34, %c0_35, %c0_36] : memref<1x32x128xf32, #tpu.memory_space<vmem>>, vector<1x32x128xf32>
      tpu.vector_store %arg6[%c0_34, %c0_35, %c0_36], %45 {strides = array<i32>} : memref<1x32x128xf32, #tpu.memory_space<vmem>>, vector<1x32x128xf32>,
    } else {
    }
    %c0 = arith.constant 0 : index
    %c0_1 = arith.constant 0 : index
    %c0_2 = arith.constant 0 : index
    %3 = vector.load %arg3[%c0, %c0_1, %c0_2] : memref<1x32x128xf32, #tpu.memory_space<vmem>>, vector<1x32x128xf32>
    %4 = vector.shape_cast %3 : vector<1x32x128xf32> to vector<32x128xf32>
    %c0_3 = arith.constant 0 : index
    %c0_4 = arith.constant 0 : index
    %c0_5 = arith.constant 0 : index
    %5 = vector.load %arg4[%c0_3, %c0_4, %c0_5] : memref<1x32x128xi8, #tpu.memory_space<vmem>>, vector<1x32x128xi8>
    %6 = vector.shape_cast %5 : vector<1x32x128xi8> to vector<32x128xi8>
    %7 = arith.sitofp %6 : vector<32x128xi8> to vector<32x128xf32>
    %c0_6 = arith.constant 0 : index
    %c0_7 = arith.constant 0 : index
    %c0_8 = arith.constant 0 : index
    %8 = vector.load %arg5[%c0_6, %c0_7, %c0_8] : memref<1x32x128xi8, #tpu.memory_space<vmem>>, vector<1x32x128xi8>
    %9 = vector.shape_cast %8 : vector<1x32x128xi8> to vector<32x128xi8>
    %10 = arith.sitofp %9 : vector<32x128xi8> to vector<32x128xf32>
    %c0_9 = arith.constant 0 : index
    %c0_10 = arith.constant 0 : index
    %c0_11 = arith.constant 0 : index
    %11 = vector.load %arg6[%c0_9, %c0_10, %c0_11] : memref<1x32x128xf32, #tpu.memory_space<vmem>>, vector<1x8x128xf32>
    %12 = vector.shape_cast %11 : vector<1x8x128xf32> to vector<8x128xf32>
    %13 = arith.mulf %4, %7 : vector<32x128xf32>
    %14 = vector.shape_cast %13 : vector<32x128xf32> to vector<4x8x128xf32>
    %cst = arith.constant dense<0.000000e+00> : vector<8x128xf32>
    %15 = vector.multi_reduction <add>, %14, %cst [0] : vector<4x8x128xf32> to vector<8x128xf32>
    %16 = arith.addf %12, %15 : vector<8x128xf32>
    %c0_12 = arith.constant 0 : index
    %c0_13 = arith.constant 0 : index
    %c0_14 = arith.constant 0 : index
    %17 = vector.load %arg6[%c0_12, %c0_13, %c0_14] : memref<1x32x128xf32, #tpu.memory_space<vmem>>, vector<1x8x128xf32>
    %18 = vector.shape_cast %17 : vector<1x8x128xf32> to vector<8x128xf32>
    %19 = vector.shape_cast %16 : vector<8x128xf32> to vector<1x8x128xf32>
    tpu.vector_store %arg6[%c0_12, %c0_13, %c0_14], %19 {strides = array<i32>} : memref<1x32x128xf32, #tpu.memory_space<vmem>>, vector<1x8x128xf32>,
    %c0_15 = arith.constant 0 : index
    %c8 = arith.constant 8 : index
    %c0_16 = arith.constant 0 : index
    %20 = vector.load %arg6[%c0_15, %c8, %c0_16] : memref<1x32x128xf32, #tpu.memory_space<vmem>>, vector<1x8x128xf32>
    %21 = vector.shape_cast %20 : vector<1x8x128xf32> to vector<8x128xf32>
    %22 = vector.shape_cast %7 : vector<32x128xf32> to vector<4x8x128xf32>
    %cst_17 = arith.constant dense<0.000000e+00> : vector<8x128xf32>
    %23 = vector.multi_reduction <add>, %22, %cst_17 [0] : vector<4x8x128xf32> to vector<8x128xf32>
    %24 = arith.addf %21, %23 : vector<8x128xf32>
    %c0_18 = arith.constant 0 : index
    %c8_19 = arith.constant 8 : index
    %c0_20 = arith.constant 0 : index
    %25 = vector.load %arg6[%c0_18, %c8_19, %c0_20] : memref<1x32x128xf32, #tpu.memory_space<vmem>>, vector<1x8x128xf32>
    %26 = vector.shape_cast %25 : vector<1x8x128xf32> to vector<8x128xf32>
    %27 = vector.shape_cast %24 : vector<8x128xf32> to vector<1x8x128xf32>
    tpu.vector_store %arg6[%c0_18, %c8_19, %c0_20], %27 {strides = array<i32>} : memref<1x32x128xf32, #tpu.memory_space<vmem>>, vector<1x8x128xf32>,
    %c0_21 = arith.constant 0 : index
    %c16 = arith.constant 16 : index
    %c0_22 = arith.constant 0 : index
    %28 = vector.load %arg6[%c0_21, %c16, %c0_22] : memref<1x32x128xf32, #tpu.memory_space<vmem>>, vector<1x8x128xf32>
    %29 = vector.shape_cast %28 : vector<1x8x128xf32> to vector<8x128xf32>
    %30 = arith.mulf %4, %10 : vector<32x128xf32>
    %31 = vector.shape_cast %30 : vector<32x128xf32> to vector<4x8x128xf32>
    %cst_23 = arith.constant dense<0.000000e+00> : vector<8x128xf32>
    %32 = vector.multi_reduction <add>, %31, %cst_23 [0] : vector<4x8x128xf32> to vector<8x128xf32>
    %33 = arith.addf %29, %32 : vector<8x128xf32>
    %c0_24 = arith.constant 0 : index
    %c16_25 = arith.constant 16 : index
    %c0_26 = arith.constant 0 : index
    %34 = vector.load %arg6[%c0_24, %c16_25, %c0_26] : memref<1x32x128xf32, #tpu.memory_space<vmem>>, vector<1x8x128xf32>
    %35 = vector.shape_cast %34 : vector<1x8x128xf32> to vector<8x128xf32>
    %36 = vector.shape_cast %33 : vector<8x128xf32> to vector<1x8x128xf32>
    tpu.vector_store %arg6[%c0_24, %c16_25, %c0_26], %36 {strides = array<i32>} : memref<1x32x128xf32, #tpu.memory_space<vmem>>, vector<1x8x128xf32>,
    %c0_27 = arith.constant 0 : index
    %c24 = arith.constant 24 : index
    %c0_28 = arith.constant 0 : index
    %37 = vector.load %arg6[%c0_27, %c24, %c0_28] : memref<1x32x128xf32, #tpu.memory_space<vmem>>, vector<1x8x128xf32>
    %38 = vector.shape_cast %37 : vector<1x8x128xf32> to vector<8x128xf32>
    %39 = vector.shape_cast %4 : vector<32x128xf32> to vector<4x8x128xf32>
    %cst_29 = arith.constant dense<0.000000e+00> : vector<8x128xf32>
    %40 = vector.multi_reduction <add>, %39, %cst_29 [0] : vector<4x8x128xf32> to vector<8x128xf32>
    %41 = arith.addf %38, %40 : vector<8x128xf32>
    %c0_30 = arith.constant 0 : index
    %c24_31 = arith.constant 24 : index
    %c0_32 = arith.constant 0 : index
    %42 = vector.load %arg6[%c0_30, %c24_31, %c0_32] : memref<1x32x128xf32, #tpu.memory_space<vmem>>, vector<1x8x128xf32>
    %43 = vector.shape_cast %42 : vector<1x8x128xf32> to vector<8x128xf32>
    %44 = vector.shape_cast %41 : vector<8x128xf32> to vector<1x8x128xf32>
    tpu.vector_store %arg6[%c0_30, %c24_31, %c0_32], %44 {strides = array<i32>} : memref<1x32x128xf32, #tpu.memory_space<vmem>>, vector<1x8x128xf32>,
    return
  }
  func.func @transform_0(%arg0: i32, %arg1: i32, %arg2: i32) -> (i32, i32, i32) {
    %c1_i32 = arith.constant 1 : i32
    %0 = arith.muli %arg1, %c1_i32 : i32
    %1 = arith.addi %0, %arg2 : i32
    %c0_i32 = arith.constant 0 : i32
    %c0_i32_0 = arith.constant 0 : i32
    return %arg0, %1, %c0_i32 : i32, i32, i32
  }
  func.func @transform_1(%arg0: i32, %arg1: i32, %arg2: i32) -> (i32, i32, i32) {
    %c1_i32 = arith.constant 1 : i32
    %0 = arith.muli %arg1, %c1_i32 : i32
    %1 = arith.addi %0, %arg2 : i32
    %c0_i32 = arith.constant 0 : i32
    %c0_i32_0 = arith.constant 0 : i32
    return %arg0, %1, %c0_i32 : i32, i32, i32
  }
  func.func @transform_2(%arg0: i32, %arg1: i32, %arg2: i32) -> (i32, i32, i32) {
    %c1_i32 = arith.constant 1 : i32
    %0 = arith.muli %arg1, %c1_i32 : i32
    %1 = arith.addi %0, %arg2 : i32
    %c0_i32 = arith.constant 0 : i32
    %c0_i32_0 = arith.constant 0 : i32
    return %arg0, %1, %c0_i32 : i32, i32, i32
  }
  func.func @transform_3(%arg0: i32, %arg1: i32, %arg2: i32) -> (i32, i32, i32) {
    %c0_i32 = arith.constant 0 : i32
    %c0_i32_0 = arith.constant 0 : i32
    return %arg0, %arg1, %c0_i32 : i32, i32, i32
  }
}

</mosaic_0001>

<llo_original>
// kernel: tpu_custom_call.1
$region0: #{tpu_custom_call.1}
  #allocation0 [shape = 'u32[]', space=smem, size = 0x4, offset = 0x4, fixed_abs, tag = 'smem constant byte address 0x4 - core index']
  #allocation1 [shape = 'u32[144,128]{1,0:T(1,128)}', space=vmem, size = 0x12000, scoped, tag = 'internal scratch']
  %s0 = inlined_call_operand.hbm [shape: f32[2,32,128], index: 0, kind: input, shape index: {}]
  %s1 = inlined_call_operand.hbm [shape: s8[2,32,128], index: 1, kind: input, shape index: {}]
  %s2 = inlined_call_operand.hbm [shape: s8[2,32,128], index: 2, kind: input, shape index: {}]
  %s3 = inlined_call_operand.hbm [shape: f32[2,32,128], index: 3, kind: output, shape index: {}]
  %s4 = sld [smem:[#allocation0]]
  $region61: #{tpu_custom_call.1} parent=0
    _
  %s6 = ssub.s32 1, %s4
  %s7 = scalar_select 0, %s6, %s4
  $region1: #{tpu_custom_call.1} parent=0
    #allocation2 [shape = 'u8[32768]{0}', space=vmem, size = 0x8000, scoped, tag = 'input window, operand 0']
    #allocation3 [shape = 's32[2]{0}', space=sflag, size = 0x8, scoped, tag = 'scoped memory for tpu_custom_call.1']
    #allocation4 [shape = 's32[2]{0}', space=sflag, size = 0x8, scoped, tag = 'scoped memory for tpu_custom_call.1']
    #allocation5 [shape = 'u8[8192]{0}', space=vmem, size = 0x2000, scoped, tag = 'input window, operand 1']
    #allocation6 [shape = 's32[2]{0}', space=sflag, size = 0x8, scoped, tag = 'scoped memory for tpu_custom_call.1']
    #allocation7 [shape = 'u8[8192]{0}', space=vmem, size = 0x2000, scoped, tag = 'input window, operand 2']
    #allocation8 [shape = 'u8[32768]{0}', space=vmem, size = 0x8000, scoped, tag = 'output window, operand 0']
    %8 = vsyncpa [#allocation3], 0
    %s9 = scalar_lea.sflag [#allocation3], 1
    %10 = vsyncpa %s9, 0
    %11 = vsyncpa [#allocation6], 0
    %s12 = scalar_lea.sflag [#allocation6], 1
    %13 = vsyncpa %s12, 0
    %14 = vsyncpa [#allocation4], 0
    %s15 = scalar_lea.sflag [#allocation4], 1
    %16 = vsyncpa %s15, 0
    loop: start=0, step=1, limit=4
    $region2: #{tpu_custom_call.1} parent=1 // loop_pre_header
      _
    $region3: #{tpu_custom_call.1} parent=1 // loop_header
      %s18 = sphi 0, %s22
      %p19 = scmp.ge.s32.totalorder %s18, 4
      %s25 = sphi 0, %s44
      %s26 = sphi 0, %s40
      %s27 = sphi 0, %s36
      %s28 = sphi 0, %s25
      %s29 = sphi 0, %s26
      %s30 = sphi 0, %s27
      %s31 = sphi 0, %s28
      %s32 = sphi 0, %s29
      %s33 = sphi 0, %s30
      %s51 = sphi 0, %s53
      %s54 = sphi 0, %s51
      %s55 = sphi 0, %s54
      %s71 = sphi 0, %s55
      %s81 = sphi 0, %s83
      %s84 = sphi 0, %s81
      %s85 = sphi 0, %s84
      %s101 = sphi 0, %s85
      %s111 = sphi 0, %s113
      %s114 = sphi 0, %s111
      %s115 = sphi 0, %s114
      %s131 = sphi 0, %s115
      %s139 = sphi 0, %s141
      %s142 = sphi 0, %s139
      %s143 = sphi 0, %s142
      %s159 = sphi 0, %s143
    $region4: #{tpu_custom_call.1} parent=1 // loop_header_branch
      %21 = sbr.rel (%p19) target = $region8
    $region5: #{tpu_custom_call.1} parent=1 // loop_body
      %s23 = ssub.s32 %s18, 1
      %s24 = ssub.s32 %s18, 2
      %s34 = sadd.s32 1, %s27
      %p35 = scmp.ge.s32.totalorder %s34, 1
      %s36 = scalar_select %p35, 0, %s34
      %s37 = sadd.s32 1, %s26
      %s38 = scalar_select %p35, %s37, %s26
      %p39 = scmp.ge.s32.totalorder %s38, 1
      %s40 = scalar_select %p39, 0, %s38
      %s41 = sadd.s32 1, %s25
      %s42 = scalar_select %p39, %s41, %s25
      %p43 = scmp.ge.s32.totalorder %s42, 2
      %s44 = scalar_select %p43, 0, %s42
      %s45 = sadd.s32 %s26, %s27
      %s46 = sadd.s32 %s40, %s36
      %s47 = ssub.s32 %s25, %s44
      %s48 = ssub.s32 %s45, %s46
      %s49 = sor.u32 %s47, %s48
      %p50 = scmp.eq.s32.totalorder %s49, 0
      %s52 = sadd.s32 %s51, 1
      %s53 = scalar_select %p50, %s51, %s52
      %p56 = pneg %p50
      %p57 = scmp.eq.s32.totalorder %s18, 1
      %p58 = por %p56, %p57
      %p59 = scmp.ne.s32.totalorder %s51, %s54
      %p60 = scmp.eq.s32.totalorder %s18, 0
      %p61 = por %p59, %p60
      %p62 = scmp.ne.s32.totalorder %s51, %s54
      %p63 = scmp.eq.s32.totalorder %s23, 1
      %p64 = por %p62, %p63
      %p65 = scmp.ne.s32.totalorder %s54, %s55
      %p66 = scmp.eq.s32.totalorder %s23, 0
      %p67 = por %p65, %p66
      %p68 = scmp.ne.s32.totalorder %s54, %s55
      %p69 = scmp.eq.s32.totalorder %s24, 1
      %p70 = por %p68, %p69
      %p72 = scmp.ne.s32.totalorder %s55, %s71
      %p73 = scmp.eq.s32.totalorder %s24, 0
      %p74 = por %p72, %p73
      %s75 = sadd.s32 %s26, %s27
      %s76 = sadd.s32 %s40, %s36
      %s77 = ssub.s32 %s25, %s44
      %s78 = ssub.s32 %s75, %s76
      %s79 = sor.u32 %s77, %s78
      %p80 = scmp.eq.s32.totalorder %s79, 0
      %s82 = sadd.s32 %s81, 1
      %s83 = scalar_select %p80, %s81, %s82
      %p86 = pneg %p80
      %p87 = scmp.eq.s32.totalorder %s18, 1
      %p88 = por %p86, %p87
      %p89 = scmp.ne.s32.totalorder %s81, %s84
      %p90 = scmp.eq.s32.totalorder %s18, 0
      %p91 = por %p89, %p90
      %p92 = scmp.ne.s32.totalorder %s81, %s84
      %p93 = scmp.eq.s32.totalorder %s23, 1
      %p94 = por %p92, %p93
      %p95 = scmp.ne.s32.totalorder %s84, %s85
      %p96 = scmp.eq.s32.totalorder %s23, 0
      %p97 = por %p95, %p96
      %p98 = scmp.ne.s32.totalorder %s84, %s85
      %p99 = scmp.eq.s32.totalorder %s24, 1
      %p100 = por %p98, %p99
      %p102 = scmp.ne.s32.totalorder %s85, %s101
      %p103 = scmp.eq.s32.totalorder %s24, 0
      %p104 = por %p102, %p103
      %s105 = sadd.s32 %s26, %s27
      %s106 = sadd.s32 %s40, %s36
      %s107 = ssub.s32 %s25, %s44
      %s108 = ssub.s32 %s105, %s106
      %s109 = sor.u32 %s107, %s108
      %p110 = scmp.eq.s32.totalorder %s109, 0
      %s112 = sadd.s32 %s111, 1
      %s113 = scalar_select %p110, %s111, %s112
      %p116 = pneg %p110
      %p117 = scmp.eq.s32.totalorder %s18, 1
      %p118 = por %p116, %p117
      %p119 = scmp.ne.s32.totalorder %s111, %s114
      %p120 = scmp.eq.s32.totalorder %s18, 0
      %p121 = por %p119, %p120
      %p122 = scmp.ne.s32.totalorder %s111, %s114
      %p123 = scmp.eq.s32.totalorder %s23, 1
      %p124 = por %p122, %p123
      %p125 = scmp.ne.s32.totalorder %s114, %s115
      %p126 = scmp.eq.s32.totalorder %s23, 0
      %p127 = por %p125, %p126
      %p128 = scmp.ne.s32.totalorder %s114, %s115
      %p129 = scmp.eq.s32.totalorder %s24, 1
      %p130 = por %p128, %p129
      %p132 = scmp.ne.s32.totalorder %s115, %s131
      %p133 = scmp.eq.s32.totalorder %s24, 0
      %p134 = por %p132, %p133
      %s135 = ssub.s32 %s25, %s44
      %s136 = ssub.s32 %s26, %s40
      %s137 = sor.u32 %s135, %s136
      %p138 = scmp.eq.s32.totalorder %s137, 0
      %s140 = sadd.s32 %s139, 1
      %s141 = scalar_select %p138, %s139, %s140
      %p144 = pneg %p138
      %p145 = scmp.eq.s32.totalorder %s18, 1
      %p146 = por %p144, %p145
      %p147 = scmp.ne.s32.totalorder %s139, %s142
      %p148 = scmp.eq.s32.totalorder %s18, 0
      %p149 = por %p147, %p148
      %p150 = scmp.ne.s32.totalorder %s139, %s142
      %p151 = scmp.eq.s32.totalorder %s23, 1
      %p152 = por %p150, %p151
      %p153 = scmp.ne.s32.totalorder %s142, %s143
      %p154 = scmp.eq.s32.totalorder %s23, 0
      %p155 = por %p153, %p154
      %p156 = scmp.ne.s32.totalorder %s142, %s143
      %p157 = scmp.eq.s32.totalorder %s24, 1
      %p158 = por %p156, %p157
      %p160 = scmp.ne.s32.totalorder %s143, %s159
      %p161 = scmp.eq.s32.totalorder %s24, 0
      %p162 = por %p160, %p161
      %p163 = scmp.le.s32.totalorder 1, %s18
      %p164 = scmp.lt.s32.totalorder %s18, 3
      %p165 = pnand %p163, %p164
      %p166 = pneg %p165
      // Predicated region
      $region9: #{tpu_custom_call.1} parent=5 // pred_check
        _
      $region10: #{tpu_custom_call.1} parent=5 // pred_check_branch
        %168 = sbr.rel (%p165) target = $region12
      $region11: #{tpu_custom_call.1} parent=5 // pred_region
        %s169 = ssub.s32 %s18, 1
      $region12: #{tpu_custom_call.1} parent=5 // pred_fallthru
        _
      %p170 = scmp.lt.s32.totalorder %s18, 2
      // Predicated region
      $region13: #{tpu_custom_call.1} parent=5 // pred_check
        %p171 = pneg %p170
      $region14: #{tpu_custom_call.1} parent=5 // pred_check_branch
        %173 = sbr.rel (%p171) target = $region16
      $region15: #{tpu_custom_call.1} parent=5 // pred_region
        // Predicated region
        $region17: #{tpu_custom_call.1} parent=15 // pred_check
          %p174 = pneg %p61
        $region18: #{tpu_custom_call.1} parent=15 // pred_check_branch
          %176 = sbr.rel (%p174) target = $region20
        $region19: #{tpu_custom_call.1} parent=15 // pred_region
          %s177 = sand.u32 %s51, 1
          %s178 = scalar_lea.sflag [#allocation3], %s177
          %s179 = sand.u32 %s51, 1
          %s180 = smul.addr %s179, 32
          %s181 = scalar_lea.vmem [#allocation2], %s180
          %s182 = sadd.s32 %s26, %s27
          %s183 = smul.u32 4, %s182
          %s185 = ssub.s32 512, 512
          %186 = vsyncadd %s178, %s185
          %s187 = smul.addr %s25, 4
          %s188 = sadd.s32 %s183, %s187
          %s189 = smul.addr %s188, 128
          %s190 = scalar_lea.hbm %s0, %s189
          %s191 = sshll.u32 %s181, 4
          %s192 = int_to_ptr.vmem [resolvable:$true] %s191
          %197 = dma.hbm_to_vmem [thread:$0]  %s190, 512, %s192, %s178, 128, 128, 8
        $region20: #{tpu_custom_call.1} parent=15 // pred_fallthru
          _
        // Predicated region
        $region21: #{tpu_custom_call.1} parent=15 // pred_check
          %p198 = pneg %p91
        $region22: #{tpu_custom_call.1} parent=15 // pred_check_branch
          %200 = sbr.rel (%p198) target = $region24
        $region23: #{tpu_custom_call.1} parent=15 // pred_region
          %s201 = sand.u32 %s18, 1
          %s202 = scalar_lea.sflag [#allocation6], %s201
          %s203 = sand.u32 %s81, 1
          %s204 = smul.addr %s203, 8
          %s205 = scalar_lea.vmem [#allocation5], %s204
          %s206 = sadd.s32 %s26, %s27
          %s208 = ssub.s32 128, 128
          %209 = vsyncadd %s202, %s208
          %s210 = sadd.s32 %s206, %s25
          %s211 = smul.addr %s210, 128
          %s212 = scalar_lea.hbm %s1, %s211
          %s214 = sshll.u32 %s205, 4
          %s215 = int_to_ptr.vmem [resolvable:$true] %s214
          %217 = dma.hbm_to_vmem [thread:$0]  %s212, 128, %s215, %s202
        $region24: #{tpu_custom_call.1} parent=15 // pred_fallthru
          _
        // Predicated region
        $region25: #{tpu_custom_call.1} parent=15 // pred_check
          %p218 = pneg %p121
        $region26: #{tpu_custom_call.1} parent=15 // pred_check_branch
          %220 = sbr.rel (%p218) target = $region28
        $region27: #{tpu_custom_call.1} parent=15 // pred_region
          %s221 = sand.u32 %s18, 1
          %s222 = scalar_lea.sflag [#allocation6], %s221
          %s223 = sand.u32 %s111, 1
          %s224 = smul.addr %s223, 8
          %s225 = scalar_lea.vmem [#allocation7], %s224
          %s226 = sadd.s32 %s26, %s27
          %s228 = ssub.s32 128, 128
          %229 = vsyncadd %s222, %s228
          %s230 = sadd.s32 %s226, %s25
          %s231 = smul.addr %s230, 128
          %s232 = scalar_lea.hbm %s2, %s231
          %s234 = sshll.u32 %s225, 4
          %s235 = int_to_ptr.vmem [resolvable:$true] %s234
          %237 = dma.hbm_to_vmem [thread:$0]  %s232, 128, %s235, %s222
        $region28: #{tpu_custom_call.1} parent=15 // pred_fallthru
          _
      $region16: #{tpu_custom_call.1} parent=5 // pred_fallthru
        _
      %p238 = scmp.le.s32.totalorder 1, %s18
      %p239 = scmp.lt.s32.totalorder %s18, 3
      %p240 = pnand %p238, %p239
      %p241 = pneg %p240
      // Predicated region
      $region29: #{tpu_custom_call.1} parent=5 // pred_check
        _
      $region30: #{tpu_custom_call.1} parent=5 // pred_check_branch
        %243 = sbr.rel (%p240) target = $region32
      $region31: #{tpu_custom_call.1} parent=5 // pred_region
        %s244 = ssub.s32 %s18, 1
        %s245 = sand.u32 %s54, 1
        %s246 = scalar_lea.sflag [#allocation3], %s245
        %s247 = sand.u32 %s54, 1
        %s248 = smul.addr %s247, 32
        %s249 = scalar_lea.vmem [#allocation2], %s248
        // Predicated region
        $region33: #{tpu_custom_call.1} parent=31 // pred_check
          %p250 = pneg %p67
        $region34: #{tpu_custom_call.1} parent=31 // pred_check_branch
          %252 = sbr.rel (%p250) target = $region36
        $region35: #{tpu_custom_call.1} parent=31 // pred_region
          %253 = dma.done %s246, 512
        $region36: #{tpu_custom_call.1} parent=31 // pred_fallthru
          _
        %s254 = sand.u32 %s23, 1
        %s255 = scalar_lea.sflag [#allocation6], %s254
        %s256 = sand.u32 %s84, 1
        %s257 = smul.addr %s256, 8
        %s258 = scalar_lea.vmem [#allocation5], %s257
        // Predicated region
        $region37: #{tpu_custom_call.1} parent=31 // pred_check
          %p259 = pneg %p97
        $region38: #{tpu_custom_call.1} parent=31 // pred_check_branch
          %261 = sbr.rel (%p259) target = $region40
        $region39: #{tpu_custom_call.1} parent=31 // pred_region
          %262 = dma.done %s255, 128
        $region40: #{tpu_custom_call.1} parent=31 // pred_fallthru
          _
        %s263 = sand.u32 %s23, 1
        %s264 = scalar_lea.sflag [#allocation6], %s263
        %s265 = sand.u32 %s114, 1
        %s266 = smul.addr %s265, 8
        %s267 = scalar_lea.vmem [#allocation7], %s266
        // Predicated region
        $region41: #{tpu_custom_call.1} parent=31 // pred_check
          %p268 = pneg %p127
        $region42: #{tpu_custom_call.1} parent=31 // pred_check_branch
          %270 = sbr.rel (%p268) target = $region44
        $region43: #{tpu_custom_call.1} parent=31 // pred_region
          %271 = dma.done %s264, 128
        $region44: #{tpu_custom_call.1} parent=31 // pred_fallthru
          _
        %s272 = sand.u32 %s54, 1
        %s273 = scalar_lea.sflag [#allocation3], %s272
        %s274 = sand.u32 %s54, 1
        %s275 = smul.addr %s274, 32
        %s276 = scalar_lea.vmem [#allocation2], %s275
        %p277 = pneg %p67
        %p278 = pneg %p64
        %s279 = sand.u32 %s23, 1
        %s280 = scalar_lea.sflag [#allocation6], %s279
        %s281 = sand.u32 %s84, 1
        %s282 = smul.addr %s281, 8
        %s283 = scalar_lea.vmem [#allocation5], %s282
        %p284 = pneg %p97
        %p285 = pneg %p94
        %s286 = sand.u32 %s23, 1
        %s287 = scalar_lea.sflag [#allocation6], %s286
        %s288 = sand.u32 %s114, 1
        %s289 = smul.addr %s288, 8
        %s290 = scalar_lea.vmem [#allocation7], %s289
        %p291 = pneg %p127
        %p292 = pneg %p124
        %p293 = pneg %p155
        %p294 = pneg %p152
        %s295 = sand.u32 %s142, 1
        %s296 = scalar_lea.sflag [#allocation4], %s295
        %s297 = sand.u32 %s142, 1
        %s298 = smul.addr %s297, 32
        %s299 = scalar_lea.vmem [#allocation8], %s298
        %s300 = sadd.s32 %s29, %s30
        %s301 = smul.u32 4, %s300
        %s302 = sadd.s32 %s29, %s30
        %s303 = sadd.s32 %s29, %s30
        %s304 = smul.u32 4, %s29
        %p305 = scmp.eq.s32.totalorder %s30, 0
        // Predicated region
        $region45: #{tpu_custom_call.1} parent=31 // pred_check
          %p306 = pneg %p305
        $region46: #{tpu_custom_call.1} parent=31 // pred_check_branch
          %308 = sbr.rel (%p306) target = $region48
        $region47: #{tpu_custom_call.1} parent=31 // pred_region
          %309 = vst [vmem:[%s299] sm:$0xff] 0.0
          %310 = vst [vmem:[%s299 + $0x8] sm:$0xff] 0.0
          %311 = vst [vmem:[%s299 + $0x10] sm:$0xff] 0.0
          %312 = vst [vmem:[%s299 + $0x18] sm:$0xff] 0.0
        $region48: #{tpu_custom_call.1} parent=31 // pred_fallthru
          _
        %v313 = vld [vmem:[%s249] sm:$0xff]
        %v314 = vld [vmem:[%s249 + $0x8] sm:$0xff]
        %v315 = vld [vmem:[%s249 + $0x10] sm:$0xff]
        %v316 = vld [vmem:[%s249 + $0x18] sm:$0xff]
        %v317 = vld [vmem:[%s258] sm:$0xff]
        %v318 = vunpack.c.0.s8 %v317
        %v319 = vunpack.c.1.s8 %v317
        %v320 = vunpack.c.2.s8 %v317
        %v321 = vunpack.c.3.s8 %v317
        %v322 = vcvt.s32.f32 %v318
        %v323 = vcvt.s32.f32 %v319
        %v324 = vcvt.s32.f32 %v320
        %v325 = vcvt.s32.f32 %v321
        %v326 = vld [vmem:[%s267] sm:$0xff]
        %v327 = vunpack.c.0.s8 %v326
        %v328 = vunpack.c.1.s8 %v326
        %v329 = vunpack.c.2.s8 %v326
        %v330 = vunpack.c.3.s8 %v326
        %v331 = vcvt.s32.f32 %v327
        %v332 = vcvt.s32.f32 %v328
        %v333 = vcvt.s32.f32 %v329
        %v334 = vcvt.s32.f32 %v330
        %v335 = vld [vmem:[%s299] sm:$0xff]
        %v336 = vmul.f32 %v313, %v322
        %v337 = vmul.f32 %v314, %v323
        %v338 = vmul.f32 %v315, %v324
        %v339 = vmul.f32 %v316, %v325
        %v340 = vadd.f32 %v336, %v337
        %v341 = vadd.f32 %v340, %v338
        %v342 = vadd.f32 %v341, %v339
        %v343 = vadd.f32 %v335, %v342
        %344 = vst [vmem:[%s299] sm:$0xff] %v343
        %v345 = vld [vmem:[%s299 + $0x8] sm:$0xff]
        %v346 = vadd.f32 %v322, %v323
        %v347 = vadd.f32 %v346, %v324
        %v348 = vadd.f32 %v347, %v325
        %v349 = vadd.f32 %v345, %v348
        %350 = vst [vmem:[%s299 + $0x8] sm:$0xff] %v349
        %v351 = vld [vmem:[%s299 + $0x10] sm:$0xff]
        %v352 = vmul.f32 %v313, %v331
        %v353 = vmul.f32 %v314, %v332
        %v354 = vmul.f32 %v315, %v333
        %v355 = vmul.f32 %v316, %v334
        %v356 = vadd.f32 %v352, %v353
        %v357 = vadd.f32 %v356, %v354
        %v358 = vadd.f32 %v357, %v355
        %v359 = vadd.f32 %v351, %v358
        %360 = vst [vmem:[%s299 + $0x10] sm:$0xff] %v359
        %v361 = vld [vmem:[%s299 + $0x18] sm:$0xff]
        %v362 = vadd.f32 %v313, %v314
        %v363 = vadd.f32 %v362, %v315
        %v364 = vadd.f32 %v363, %v316
        %v365 = vadd.f32 %v361, %v364
        %366 = vst [vmem:[%s299 + $0x18] sm:$0xff] %v365
        %s367 = sand.u32 %s142, 1
        %s368 = scalar_lea.sflag [#allocation4], %s367
        %s369 = sand.u32 %s142, 1
        %s370 = smul.addr %s369, 32
        %s371 = scalar_lea.vmem [#allocation8], %s370
        // Predicated region
        $region49: #{tpu_custom_call.1} parent=31 // pred_check
          %p372 = pneg %p152
        $region50: #{tpu_custom_call.1} parent=31 // pred_check_branch
          %374 = sbr.rel (%p372) target = $region52
        $region51: #{tpu_custom_call.1} parent=31 // pred_region
          %s375 = smul.u32 4, %s29
          %s377 = ssub.s32 512, 512
          %378 = vsyncadd %s368, %s377
          %s379 = smul.addr %s28, 4
          %s380 = sadd.s32 %s375, %s379
          %s381 = smul.addr %s380, 128
          %s382 = scalar_lea.hbm %s3, %s381
          %s383 = sshll.u32 %s371, 4
          %s384 = int_to_ptr.vmem [resolvable:$true] %s383
          %389 = dma.vmem_to_hbm [thread:$0]  %s384, 512, %s382, %s368, 128, 128, 8
        $region52: #{tpu_custom_call.1} parent=31 // pred_fallthru
          _
      $region32: #{tpu_custom_call.1} parent=5 // pred_fallthru
        _
      %p390 = scmp.le.s32.totalorder 2, %s18
      // Predicated region
      $region53: #{tpu_custom_call.1} parent=5 // pred_check
        %p391 = pneg %p390
      $region54: #{tpu_custom_call.1} parent=5 // pred_check_branch
        %393 = sbr.rel (%p391) target = $region56
      $region55: #{tpu_custom_call.1} parent=5 // pred_region
        %s394 = ssub.s32 %s18, 2
        // Predicated region
        $region57: #{tpu_custom_call.1} parent=55 // pred_check
          %p395 = pneg %p158
        $region58: #{tpu_custom_call.1} parent=55 // pred_check_branch
          %397 = sbr.rel (%p395) target = $region60
        $region59: #{tpu_custom_call.1} parent=55 // pred_region
          %s398 = sand.u32 %s143, 1
          %s399 = scalar_lea.sflag [#allocation4], %s398
          %s400 = sand.u32 %s143, 1
          %s401 = smul.addr %s400, 32
          %s402 = scalar_lea.vmem [#allocation8], %s401
          %403 = dma.done %s399, 512
        $region60: #{tpu_custom_call.1} parent=55 // pred_fallthru
          _
      $region56: #{tpu_custom_call.1} parent=5 // pred_fallthru
        _
    $region6: #{tpu_custom_call.1} parent=1 // loop_footer
      %s22 = sadd.s32 1, %s18
    $region7: #{tpu_custom_call.1} parent=1 // loop_footer_branch
      %17 = sbr.rel target = $region3
    $region8: #{tpu_custom_call.1} parent=1 // loop_exit
      _
    %404 = vsyncpa [#allocation3], 1
    %s405 = scalar_lea.sflag [#allocation3], 1
    %406 = vsyncpa %s405, 1
    %407 = vsyncpa [#allocation6], 1
    %s408 = scalar_lea.sflag [#allocation6], 1
    %409 = vsyncpa %s408, 1
    %410 = vsyncpa [#allocation4], 1
    %s411 = scalar_lea.sflag [#allocation4], 1
    %412 = vsyncpa %s411, 1

</llo_original>
